<compile_context>
chip_gen: v6e
topology: v6e:2x2x1
jax: 0.10.0
libtpu: 0.0.40
codegen_flags: <defaults>
</compile_context>

<pallas_src>
import functools
import math

import jax
import jax.numpy as jnp
from jax import lax
from jax.experimental import pallas as pl
from jax.experimental.pallas import tpu as pltpu


def basic_block_kernel(x_ref, w_ref, scale_ref, shift_ref, mask_ref, out_ref,
                       aflat_ref, patch_ref, *, W):
    # x_ref:     (1, Cin, H*W)        input, NCHW with spatial flattened (lane-dense)
    # w_ref:     (Cout, 9*Cin)        conv weights, K index = (kh*3 + kw)*Cin + ci
    # scale_ref: (Cin, 1)             folded BN scale = gamma / sqrt(var + eps)
    # shift_ref: (Cin, 1)             folded BN shift = beta - mean * scale
    # mask_ref:  (3, H*W)             0/1 row-edge validity masks for kw = 0, 1, 2
    # out_ref:   (1, Cin+Cout, H*W)   [x ; conv(relu(bn(x)))] along channels
    # aflat_ref: (Cin, H*W + 2*(W+1)) VMEM scratch: flat activation, zero borders
    # patch_ref: (9*Cin, H*W)         VMEM scratch: im2col patch (single matmul K)
    Cin = x_ref.shape[1]
    HW = x_ref.shape[2]
    pad = W + 1

    x2d = x_ref[0]                                           # (Cin, H*W)

    # BatchNorm (inference, folded) + ReLU -- lane-dense elementwise.
    a = jnp.maximum(x2d * scale_ref[...] + shift_ref[...], 0.0)

    # Flat zero-bordered activation: each conv tap becomes a plain lane-offset load.
    aflat_ref[...] = jnp.zeros_like(aflat_ref)
    aflat_ref[:, pad:pad + HW] = a

    # im2col: patch[(kh*3+kw)*Cin + ci, h*W + w] = relu(bn(x))[ci, h+kh-1, w+kw-1]
    # (zero outside the image).  Top/bottom zeros come from the scratch borders,
    # left/right-edge zeros from mask_ref (fixes row wrap-around of the flat shift).
    for kh in range(3):
        for kw in range(3):
            tap = kh * 3 + kw
            s = (kh - 1) * W + (kw - 1)
            shifted = aflat_ref[:, pad + s:pad + s + HW]     # (Cin, H*W)
            if kw != 1:
                shifted = shifted * mask_ref[kw:kw + 1, :]
            patch_ref[tap * Cin:(tap + 1) * Cin, :] = shifted

    # Single MXU contraction: (Cout, 9*Cin) @ (9*Cin, H*W) -> (Cout, H*W), NCHW-native.
    conv = jnp.dot(w_ref[...], patch_ref[...],
                   preferred_element_type=jnp.float32)

    # concat([x, conv], channel) into the lane-dense output block (single HBM
    # writeback DMA per grid step, last dim = H*W lanes).
    out_ref[0, :Cin, :] = x2d
    out_ref[0, Cin:, :] = conv.astype(out_ref.dtype)


def basic_block(x_nchw, w_oihw, gamma, beta, running_mean, running_var,
                eps=1e-5):
    N, Cin, H, W = x_nchw.shape
    Cout = w_oihw.shape[0]
    HW = H * W
    pad = W + 1

    # Glue: metadata reshapes + BN folding only (no activation transposes).
    x_flat = x_nchw.reshape(N, Cin, HW).astype(jnp.float32)
    # (Cout, Cin, 3, 3) -> (Cout, 9*Cin) with K index (kh*3+kw)*Cin + ci
    w_mat = jnp.transpose(w_oihw, (0, 2, 3, 1)).reshape(Cout, 9 * Cin)
    w_mat = w_mat.astype(jnp.float32)

    inv_std = 1.0 / jnp.sqrt(running_var.astype(jnp.float32) + eps)
    scale = (gamma * inv_std).reshape(Cin, 1).astype(jnp.float32)
    shift = (beta - running_mean * gamma * inv_std).reshape(Cin, 1)
    shift = shift.astype(jnp.float32)

    # Row-edge validity masks for the kw = 0 / 1 / 2 taps (0/1 f32, lane-dense).
    w_pos = jnp.arange(HW, dtype=jnp.int32) % W
    mask = jnp.stack([
        (w_pos >= 1).astype(jnp.float32),        # kw=0: needs w-1 >= 0
        jnp.ones((HW,), jnp.float32),            # kw=1: always valid
        (w_pos <= W - 2).astype(jnp.float32),    # kw=2: needs w+1 <  W
    ], axis=0)                                   # (3, H*W)

    kernel = functools.partial(basic_block_kernel, W=W)

    out_flat = pl.pallas_call(
        kernel,
        out_shape=jax.ShapeDtypeStruct((N, Cin + Cout, HW), jnp.float32),
        grid_spec=pltpu.PrefetchScalarGridSpec(
            num_scalar_prefetch=0,
            grid=(N,),
            in_specs=[
                pl.BlockSpec((1, Cin, HW), lambda b: (b, 0, 0)),
                pl.BlockSpec((Cout, 9 * Cin), lambda b: (0, 0)),
                pl.BlockSpec((Cin, 1), lambda b: (0, 0)),
                pl.BlockSpec((Cin, 1), lambda b: (0, 0)),
                pl.BlockSpec((3, HW), lambda b: (0, 0)),
            ],
            out_specs=pl.BlockSpec((1, Cin + Cout, HW),
                                   lambda b: (b, 0, 0)),
            scratch_shapes=[
                pltpu.VMEM((Cin, HW + 2 * pad), jnp.float32),
                pltpu.VMEM((9 * Cin, HW), jnp.float32),
            ],
        ),
        compiler_params=pltpu.CompilerParams(
            dimension_semantics=("parallel",)),
    )(x_flat, w_mat, scale, shift, mask)

    # Pure metadata reshape back to NCHW.
    return out_flat.reshape(N, Cin + Cout, H, W)


def basic_block_reference(x_nchw, w_oihw, gamma, beta, running_mean,
                          running_var, eps=1e-5):
    # Pure-JAX reference (matches the torch forward in eval mode, dropout p=0).
    xhat = (x_nchw - running_mean[None, :, None, None]) / jnp.sqrt(
        running_var[None, :, None, None] + eps)
    a = jnp.maximum(xhat * gamma[None, :, None, None] +
                    beta[None, :, None, None], 0.0)
    conv = lax.conv_general_dilated(
        a, w_oihw, window_strides=(1, 1), padding=((1, 1), (1, 1)),
        dimension_numbers=("NCHW", "OIHW", "NCHW"))
    return jnp.concatenate([x_nchw, conv], axis=1)


if __name__ == "__main__":
    N, Cin, H, W, growth = 2, 4, 16, 16, 8

    key = jax.random.PRNGKey(0)
    k_x, k_w, k_g, k_b, k_m, k_v = jax.random.split(key, 6)

    x = jax.random.normal(k_x, (N, Cin, H, W), jnp.float32)
    # conv weight matches nn.Conv2d(inplanes, growth_rate, 3): (Cout, Cin, 3, 3)
    w = jax.random.normal(k_w, (growth, Cin, 3, 3), jnp.float32) * (
        1.0 / math.sqrt(Cin * 9))
    gamma = jax.random.uniform(k_g, (Cin,), jnp.float32, 0.5, 1.5)
    beta = jax.random.normal(k_b, (Cin,), jnp.float32) * 0.1
    running_mean = jax.random.normal(k_m, (Cin,), jnp.float32) * 0.1
    running_var = jax.random.uniform(k_v, (Cin,), jnp.float32, 0.5, 1.5)

    out = basic_block(x, w, gamma, beta, running_mean, running_var)
    out = jax.block_until_ready(out)

    ref = basic_block_reference(x, w, gamma, beta, running_mean, running_var)
    assert out.shape == (N, Cin + growth, H, W), out.shape
    max_err = float(jnp.max(jnp.abs(out - ref)))
    assert jnp.allclose(out, ref, atol=1e-4, rtol=1e-4), max_err

    print("KERNEL_OK")
</pallas_src>

<mosaic_0001>
module attributes {stable_mosaic.version = 11 : i64} {
  func.func @basic_block_kernel(%arg0: i32, %arg1: memref<1x4x256xf32, #tpu.memory_space<vmem>>, %arg2: memref<8x36xf32, #tpu.memory_space<vmem>>, %arg3: memref<4x1xf32, #tpu.memory_space<vmem>>, %arg4: memref<4x1xf32, #tpu.memory_space<vmem>>, %arg5: memref<3x256xf32, #tpu.memory_space<vmem>>, %arg6: memref<1x12x256xf32, #tpu.memory_space<vmem>>, %arg7: memref<4x290xf32, #tpu.memory_space<vmem>>, %arg8: memref<36x256xf32, #tpu.memory_space<vmem>>) attributes {dimension_semantics = [#tpu.dimension_semantics<parallel>], iteration_bounds = array<i64: 2>, scalar_prefetch = 0 : i64, scratch_operands = 2 : i64, tpu.core_type = #tpu.core_type<tc>, window_params = [{transform_indices = @transform_0, window_bounds = array<i64: 1, 4, 256>}, {pipeline_mode = #tpu.pipeline_mode<synchronous>, transform_indices = @transform_1, window_bounds = array<i64: 8, 36>}, {pipeline_mode = #tpu.pipeline_mode<synchronous>, transform_indices = @transform_2, window_bounds = array<i64: 4, 1>}, {pipeline_mode = #tpu.pipeline_mode<synchronous>, transform_indices = @transform_3, window_bounds = array<i64: 4, 1>}, {pipeline_mode = #tpu.pipeline_mode<synchronous>, transform_indices = @transform_4, window_bounds = array<i64: 3, 256>}, {transform_indices = @transform_5, window_bounds = array<i64: 1, 12, 256>}]} {
    %c0 = arith.constant 0 : index
    %c0_0 = arith.constant 0 : index
    %c0_1 = arith.constant 0 : index
    %0 = vector.load %arg1[%c0, %c0_0, %c0_1] : memref<1x4x256xf32, #tpu.memory_space<vmem>>, vector<1x4x256xf32>
    %1 = vector.shape_cast %0 : vector<1x4x256xf32> to vector<4x256xf32>
    %c0_2 = arith.constant 0 : index
    %c0_3 = arith.constant 0 : index
    %2 = vector.load %arg3[%c0_2, %c0_3] : memref<4x1xf32, #tpu.memory_space<vmem>>, vector<4x1xf32>
    %3 = vector.broadcast %2 : vector<4x1xf32> to vector<4x256xf32>
    %4 = arith.mulf %1, %3 : vector<4x256xf32>
    %c0_4 = arith.constant 0 : index
    %c0_5 = arith.constant 0 : index
    %5 = vector.load %arg4[%c0_4, %c0_5] : memref<4x1xf32, #tpu.memory_space<vmem>>, vector<4x1xf32>
    %6 = vector.broadcast %5 : vector<4x1xf32> to vector<4x256xf32>
    %7 = arith.addf %4, %6 : vector<4x256xf32>
    %cst = arith.constant 0.000000e+00 : f32
    %8 = vector.broadcast %cst : f32 to vector<4x256xf32>
    %9 = arith.maximumf %7, %8 : vector<4x256xf32>
    %cst_6 = arith.constant 0.000000e+00 : f32
    %10 = vector.broadcast %cst_6 : f32 to vector<4x290xf32>
    %c0_7 = arith.constant 0 : index
    %c0_8 = arith.constant 0 : index
    %11 = vector.load %arg7[%c0_7, %c0_8] : memref<4x290xf32, #tpu.memory_space<vmem>>, vector<4x290xf32>
    tpu.vector_store %arg7[%c0_7, %c0_8], %10 {strides = array<i32>} : memref<4x290xf32, #tpu.memory_space<vmem>>, vector<4x290xf32>,
    %c0_9 = arith.constant 0 : index
    %c17 = arith.constant 17 : index
    %12 = vector.load %arg7[%c0_9, %c17] : memref<4x290xf32, #tpu.memory_space<vmem>>, vector<4x256xf32>
    tpu.vector_store %arg7[%c0_9, %c17], %9 {strides = array<i32>} : memref<4x290xf32, #tpu.memory_space<vmem>>, vector<4x256xf32>,
    %c0_10 = arith.constant 0 : index
    %c0_11 = arith.constant 0 : index
    %13 = vector.load %arg7[%c0_10, %c0_11] : memref<4x290xf32, #tpu.memory_space<vmem>>, vector<4x256xf32>
    %c0_12 = arith.constant 0 : index
    %c0_13 = arith.constant 0 : index
    %14 = vector.load %arg5[%c0_12, %c0_13] : memref<3x256xf32, #tpu.memory_space<vmem>>, vector<1x256xf32>
    %15 = vector.broadcast %14 : vector<1x256xf32> to vector<4x256xf32>
    %16 = arith.mulf %13, %15 : vector<4x256xf32>
    %c0_14 = arith.constant 0 : index
    %c0_15 = arith.constant 0 : index
    %17 = vector.load %arg8[%c0_14, %c0_15] : memref<36x256xf32, #tpu.memory_space<vmem>>, vector<4x256xf32>
    tpu.vector_store %arg8[%c0_14, %c0_15], %16 {strides = array<i32>} : memref<36x256xf32, #tpu.memory_space<vmem>>, vector<4x256xf32>,
    %c0_16 = arith.constant 0 : index
    %c1 = arith.constant 1 : index
    %18 = vector.load %arg7[%c0_16, %c1] : memref<4x290xf32, #tpu.memory_space<vmem>>, vector<4x256xf32>
    %c4 = arith.constant 4 : index
    %c0_17 = arith.constant 0 : index
    %19 = vector.load %arg8[%c4, %c0_17] : memref<36x256xf32, #tpu.memory_space<vmem>>, vector<4x256xf32>
    tpu.vector_store %arg8[%c4, %c0_17], %18 {strides = array<i32>} : memref<36x256xf32, #tpu.memory_space<vmem>>, vector<4x256xf32>,
    %c0_18 = arith.constant 0 : index
    %c2 = arith.constant 2 : index
    %20 = vector.load %arg7[%c0_18, %c2] : memref<4x290xf32, #tpu.memory_space<vmem>>, vector<4x256xf32>
    %c2_19 = arith.constant 2 : index
    %c0_20 = arith.constant 0 : index
    %21 = vector.load %arg5[%c2_19, %c0_20] : memref<3x256xf32, #tpu.memory_space<vmem>>, vector<1x256xf32>
    %22 = vector.broadcast %21 : vector<1x256xf32> to vector<4x256xf32>
    %23 = arith.mulf %20, %22 : vector<4x256xf32>
    %c8 = arith.constant 8 : index
    %c0_21 = arith.constant 0 : index
    %24 = vector.load %arg8[%c8, %c0_21] : memref<36x256xf32, #tpu.memory_space<vmem>>, vector<4x256xf32>
    tpu.vector_store %arg8[%c8, %c0_21], %23 {strides = array<i32>} : memref<36x256xf32, #tpu.memory_space<vmem>>, vector<4x256xf32>,
    %c0_22 = arith.constant 0 : index
    %c16 = arith.constant 16 : index
    %25 = vector.load %arg7[%c0_22, %c16] : memref<4x290xf32, #tpu.memory_space<vmem>>, vector<4x256xf32>
    %c0_23 = arith.constant 0 : index
    %c0_24 = arith.constant 0 : index
    %26 = vector.load %arg5[%c0_23, %c0_24] : memref<3x256xf32, #tpu.memory_space<vmem>>, vector<1x256xf32>
    %27 = vector.broadcast %26 : vector<1x256xf32> to vector<4x256xf32>
    %28 = arith.mulf %25, %27 : vector<4x256xf32>
    %c12 = arith.constant 12 : index
    %c0_25 = arith.constant 0 : index
    %29 = vector.load %arg8[%c12, %c0_25] : memref<36x256xf32, #tpu.memory_space<vmem>>, vector<4x256xf32>
    tpu.vector_store %arg8[%c12, %c0_25], %28 {strides = array<i32>} : memref<36x256xf32, #tpu.memory_space<vmem>>, vector<4x256xf32>,
    %c0_26 = arith.constant 0 : index
    %c17_27 = arith.constant 17 : index
    %30 = vector.load %arg7[%c0_26, %c17_27] : memref<4x290xf32, #tpu.memory_space<vmem>>, vector<4x256xf32>
    %c16_28 = arith.constant 16 : index
    %c0_29 = arith.constant 0 : index
    %31 = vector.load %arg8[%c16_28, %c0_29] : memref<36x256xf32, #tpu.memory_space<vmem>>, vector<4x256xf32>
    tpu.vector_store %arg8[%c16_28, %c0_29], %30 {strides = array<i32>} : memref<36x256xf32, #tpu.memory_space<vmem>>, vector<4x256xf32>,
    %c0_30 = arith.constant 0 : index
    %c18 = arith.constant 18 : index
    %32 = vector.load %arg7[%c0_30, %c18] : memref<4x290xf32, #tpu.memory_space<vmem>>, vector<4x256xf32>
    %c2_31 = arith.constant 2 : index
    %c0_32 = arith.constant 0 : index
    %33 = vector.load %arg5[%c2_31, %c0_32] : memref<3x256xf32, #tpu.memory_space<vmem>>, vector<1x256xf32>
    %34 = vector.broadcast %33 : vector<1x256xf32> to vector<4x256xf32>
    %35 = arith.mulf %32, %34 : vector<4x256xf32>
    %c20 = arith.constant 20 : index
    %c0_33 = arith.constant 0 : index
    %36 = vector.load %arg8[%c20, %c0_33] : memref<36x256xf32, #tpu.memory_space<vmem>>, vector<4x256xf32>
    tpu.vector_store %arg8[%c20, %c0_33], %35 {strides = array<i32>} : memref<36x256xf32, #tpu.memory_space<vmem>>, vector<4x256xf32>,
    %c0_34 = arith.constant 0 : index
    %c32 = arith.constant 32 : index
    %37 = vector.load %arg7[%c0_34, %c32] : memref<4x290xf32, #tpu.memory_space<vmem>>, vector<4x256xf32>
    %c0_35 = arith.constant 0 : index
    %c0_36 = arith.constant 0 : index
    %38 = vector.load %arg5[%c0_35, %c0_36] : memref<3x256xf32, #tpu.memory_space<vmem>>, vector<1x256xf32>
    %39 = vector.broadcast %38 : vector<1x256xf32> to vector<4x256xf32>
    %40 = arith.mulf %37, %39 : vector<4x256xf32>
    %c24 = arith.constant 24 : index
    %c0_37 = arith.constant 0 : index
    %41 = vector.load %arg8[%c24, %c0_37] : memref<36x256xf32, #tpu.memory_space<vmem>>, vector<4x256xf32>
    tpu.vector_store %arg8[%c24, %c0_37], %40 {strides = array<i32>} : memref<36x256xf32, #tpu.memory_space<vmem>>, vector<4x256xf32>,
    %c0_38 = arith.constant 0 : index
    %c33 = arith.constant 33 : index
    %42 = vector.load %arg7[%c0_38, %c33] : memref<4x290xf32, #tpu.memory_space<vmem>>, vector<4x256xf32>
    %c28 = arith.constant 28 : index
    %c0_39 = arith.constant 0 : index
    %43 = vector.load %arg8[%c28, %c0_39] : memref<36x256xf32, #tpu.memory_space<vmem>>, vector<4x256xf32>
    tpu.vector_store %arg8[%c28, %c0_39], %42 {strides = array<i32>} : memref<36x256xf32, #tpu.memory_space<vmem>>, vector<4x256xf32>,
    %c0_40 = arith.constant 0 : index
    %c34 = arith.constant 34 : index
    %44 = vector.load %arg7[%c0_40, %c34] : memref<4x290xf32, #tpu.memory_space<vmem>>, vector<4x256xf32>
    %c2_41 = arith.constant 2 : index
    %c0_42 = arith.constant 0 : index
    %45 = vector.load %arg5[%c2_41, %c0_42] : memref<3x256xf32, #tpu.memory_space<vmem>>, vector<1x256xf32>
    %46 = vector.broadcast %45 : vector<1x256xf32> to vector<4x256xf32>
    %47 = arith.mulf %44, %46 : vector<4x256xf32>
    %c32_43 = arith.constant 32 : index
    %c0_44 = arith.constant 0 : index
    %48 = vector.load %arg8[%c32_43, %c0_44] : memref<36x256xf32, #tpu.memory_space<vmem>>, vector<4x256xf32>
    tpu.vector_store %arg8[%c32_43, %c0_44], %47 {strides = array<i32>} : memref<36x256xf32, #tpu.memory_space<vmem>>, vector<4x256xf32>,
    %c0_45 = arith.constant 0 : index
    %c0_46 = arith.constant 0 : index
    %49 = vector.load %arg2[%c0_45, %c0_46] : memref<8x36xf32, #tpu.memory_space<vmem>>, vector<8x36xf32>
    %c0_47 = arith.constant 0 : index
    %c0_48 = arith.constant 0 : index
    %50 = vector.load %arg8[%c0_47, %c0_48] : memref<36x256xf32, #tpu.memory_space<vmem>>, vector<36x256xf32>
    %cst_49 = arith.constant dense<0.000000e+00> : vector<8x256xf32>
    %51 = tpu.matmul %49, %50, %cst_49 {dimension_numbers = #tpu.dot_dimension_numbers<[1], [0], [0], [1], [0, 0, 1, 1], [], []>} : vector<8x36xf32>, vector<36x256xf32>, vector<8x256xf32> -> vector<8x256xf32>
    %c0_50 = arith.constant 0 : index
    %c0_51 = arith.constant 0 : index
    %c0_52 = arith.constant 0 : index
    %52 = vector.load %arg6[%c0_50, %c0_51, %c0_52] : memref<1x12x256xf32, #tpu.memory_space<vmem>>, vector<1x4x256xf32>
    %53 = vector.shape_cast %52 : vector<1x4x256xf32> to vector<4x256xf32>
    %54 = vector.shape_cast %1 : vector<4x256xf32> to vector<1x4x256xf32>
    tpu.vector_store %arg6[%c0_50, %c0_51, %c0_52], %54 {strides = array<i32>} : memref<1x12x256xf32, #tpu.memory_space<vmem>>, vector<1x4x256xf32>,
    %c0_53 = arith.constant 0 : index
    %c4_54 = arith.constant 4 : index
    %c0_55 = arith.constant 0 : index
    %55 = vector.load %arg6[%c0_53, %c4_54, %c0_55] : memref<1x12x256xf32, #tpu.memory_space<vmem>>, vector<1x8x256xf32>
    %56 = vector.shape_cast %55 : vector<1x8x256xf32> to vector<8x256xf32>
    %57 = vector.shape_cast %51 : vector<8x256xf32> to vector<1x8x256xf32>
    tpu.vector_store %arg6[%c0_53, %c4_54, %c0_55], %57 {strides = array<i32>} : memref<1x12x256xf32, #tpu.memory_space<vmem>>, vector<1x8x256xf32>,
    return
  }
  func.func @transform_0(%arg0: i32) -> (i32, i32, i32) {
    %c0_i32 = arith.constant 0 : i32
    %c0_i32_0 = arith.constant 0 : i32
    %c0_i32_1 = arith.constant 0 : i32
    return %arg0, %c0_i32, %c0_i32_0 : i32, i32, i32
  }
  func.func @transform_1(%arg0: i32) -> (i32, i32) {
    %c0_i32 = arith.constant 0 : i32
    %c0_i32_0 = arith.constant 0 : i32
    %c0_i32_1 = arith.constant 0 : i32
    return %c0_i32, %c0_i32_0 : i32, i32
  }
  func.func @transform_2(%arg0: i32) -> (i32, i32) {
    %c0_i32 = arith.constant 0 : i32
    %c0_i32_0 = arith.constant 0 : i32
    %c0_i32_1 = arith.constant 0 : i32
    return %c0_i32, %c0_i32_0 : i32, i32
  }
  func.func @transform_3(%arg0: i32) -> (i32, i32) {
    %c0_i32 = arith.constant 0 : i32
    %c0_i32_0 = arith.constant 0 : i32
    %c0_i32_1 = arith.constant 0 : i32
    return %c0_i32, %c0_i32_0 : i32, i32
  }
  func.func @transform_4(%arg0: i32) -> (i32, i32) {
    %c0_i32 = arith.constant 0 : i32
    %c0_i32_0 = arith.constant 0 : i32
    %c0_i32_1 = arith.constant 0 : i32
    return %c0_i32, %c0_i32_0 : i32, i32
  }
  func.func @transform_5(%arg0: i32) -> (i32, i32, i32) {
    %c0_i32 = arith.constant 0 : i32
    %c0_i32_0 = arith.constant 0 : i32
    %c0_i32_1 = arith.constant 0 : i32
    return %arg0, %c0_i32, %c0_i32_0 : i32, i32, i32
  }
}

</mosaic_0001>

<llo_original>
// kernel: tpu_custom_call.1
$region0: #{tpu_custom_call.1}
  #allocation0 [shape = 'u32[]', space=smem, size = 0x4, offset = 0x4, fixed_abs, tag = 'smem constant byte address 0x4 - core index']
  #allocation1 [shape = 'u32[144,128]{1,0:T(1,128)}', space=vmem, size = 0x12000, scoped, tag = 'internal scratch']
  #allocation2 [shape = 'f32[4,290]{1,0:T(4,128)}', space=vmem, size = 0x1800, scoped, tag = 'scratch operand']
  #allocation3 [shape = 'f32[36,256]{1,0:T(8,128)}', space=vmem, size = 0xa000, scoped, tag = 'scratch operand']
  %s0 = inlined_call_operand.hbm [shape: f32[2,4,256], index: 0, kind: input, shape index: {}]
  %s1 = inlined_call_operand.vmem [shape: f32[8,36], index: 1, kind: input, shape index: {}]
  %s2 = inlined_call_operand.vmem [shape: f32[4,1], index: 2, kind: input, shape index: {}]
  %s3 = inlined_call_operand.vmem [shape: f32[4,1], index: 3, kind: input, shape index: {}]
  %s4 = inlined_call_operand.vmem [shape: f32[3,256], index: 4, kind: input, shape index: {}]
  %s5 = inlined_call_operand.vmem [shape: f32[2,12,256], index: 5, kind: output, shape index: {}]
  %s6 = sld [smem:[#allocation0]]
  $region57: #{tpu_custom_call.1} parent=0
    _
  %s8 = ssub.s32 1, %s6
  %s9 = scalar_select 0, %s8, %s6
  $region1: #{tpu_custom_call.1} parent=0
    #allocation4 [shape = 'u8[8192]{0}', space=vmem, size = 0x2000, scoped, tag = 'input window, operand 0']
    #allocation5 [shape = 's32[2]{0}', space=sflag, size = 0x8, scoped, tag = 'scoped memory for tpu_custom_call.1']
    %10 = vsyncpa [#allocation5], 0
    %s11 = scalar_lea.sflag [#allocation5], 1
    %12 = vsyncpa %s11, 0
    loop: start=0, step=1, limit=4
    $region2: #{tpu_custom_call.1} parent=1 // loop_pre_header
      _
    $region3: #{tpu_custom_call.1} parent=1 // loop_header
      %s14 = sphi 0, %s18
      %p15 = scmp.ge.s32.totalorder %s14, 4
      %s24 = sphi 0, %s26
      %s27 = sphi 0, %s24
      %s28 = sphi 0, %s27
      %s44 = sphi 0, %s28
      %s48 = sphi 0, %s48
      %s50 = sphi 0, %s48
      %s51 = sphi 0, %s50
      %s65 = sphi 0, %s51
      %s69 = sphi 0, %s69
      %s71 = sphi 0, %s69
      %s72 = sphi 0, %s71
      %s86 = sphi 0, %s72
      %s90 = sphi 0, %s90
      %s92 = sphi 0, %s90
      %s93 = sphi 0, %s92
      %s107 = sphi 0, %s93
      %s111 = sphi 0, %s111
      %s113 = sphi 0, %s111
      %s114 = sphi 0, %s113
      %s128 = sphi 0, %s114
      %s134 = sphi 0, %s136
      %s137 = sphi 0, %s134
      %s138 = sphi 0, %s137
      %s154 = sphi 0, %s138
    $region4: #{tpu_custom_call.1} parent=1 // loop_header_branch
      %17 = sbr.rel (%p15) target = $region8
    $region5: #{tpu_custom_call.1} parent=1 // loop_body
      %s19 = ssub.s32 %s14, 1
      %s20 = ssub.s32 %s14, 2
      %s21 = sadd.s32 %s14, 1
      %s22 = ssub.s32 %s14, %s21
      %p23 = scmp.eq.s32.totalorder %s22, 0
      %s25 = sadd.s32 %s24, 1
      %s26 = scalar_select %p23, %s24, %s25
      %p29 = pneg %p23
      %p30 = scmp.eq.s32.totalorder %s14, 1
      %p31 = por %p29, %p30
      %p32 = scmp.ne.s32.totalorder %s24, %s27
      %p33 = scmp.eq.s32.totalorder %s14, 0
      %p34 = por %p32, %p33
      %p35 = scmp.ne.s32.totalorder %s24, %s27
      %p36 = scmp.eq.s32.totalorder %s19, 1
      %p37 = por %p35, %p36
      %p38 = scmp.ne.s32.totalorder %s27, %s28
      %p39 = scmp.eq.s32.totalorder %s19, 0
      %p40 = por %p38, %p39
      %p41 = scmp.ne.s32.totalorder %s27, %s28
      %p42 = scmp.eq.s32.totalorder %s20, 1
      %p43 = por %p41, %p42
      %p45 = scmp.ne.s32.totalorder %s28, %s44
      %p46 = scmp.eq.s32.totalorder %s20, 0
      %p47 = por %p45, %p46
      %s49 = sadd.s32 %s48, 1
      %p52 = scmp.eq.s32.totalorder %s14, 1
      %p53 = scmp.ne.s32.totalorder %s48, %s50
      %p54 = scmp.eq.s32.totalorder %s14, 0
      %p55 = por %p53, %p54
      %p56 = scmp.ne.s32.totalorder %s48, %s50
      %p57 = scmp.eq.s32.totalorder %s19, 1
      %p58 = por %p56, %p57
      %p59 = scmp.ne.s32.totalorder %s50, %s51
      %p60 = scmp.eq.s32.totalorder %s19, 0
      %p61 = por %p59, %p60
      %p62 = scmp.ne.s32.totalorder %s50, %s51
      %p63 = scmp.eq.s32.totalorder %s20, 1
      %p64 = por %p62, %p63
      %p66 = scmp.ne.s32.totalorder %s51, %s65
      %p67 = scmp.eq.s32.totalorder %s20, 0
      %p68 = por %p66, %p67
      %s70 = sadd.s32 %s69, 1
      %p73 = scmp.eq.s32.totalorder %s14, 1
      %p74 = scmp.ne.s32.totalorder %s69, %s71
      %p75 = scmp.eq.s32.totalorder %s14, 0
      %p76 = por %p74, %p75
      %p77 = scmp.ne.s32.totalorder %s69, %s71
      %p78 = scmp.eq.s32.totalorder %s19, 1
      %p79 = por %p77, %p78
      %p80 = scmp.ne.s32.totalorder %s71, %s72
      %p81 = scmp.eq.s32.totalorder %s19, 0
      %p82 = por %p80, %p81
      %p83 = scmp.ne.s32.totalorder %s71, %s72
      %p84 = scmp.eq.s32.totalorder %s20, 1
      %p85 = por %p83, %p84
      %p87 = scmp.ne.s32.totalorder %s72, %s86
      %p88 = scmp.eq.s32.totalorder %s20, 0
      %p89 = por %p87, %p88
      %s91 = sadd.s32 %s90, 1
      %p94 = scmp.eq.s32.totalorder %s14, 1
      %p95 = scmp.ne.s32.totalorder %s90, %s92
      %p96 = scmp.eq.s32.totalorder %s14, 0
      %p97 = por %p95, %p96
      %p98 = scmp.ne.s32.totalorder %s90, %s92
      %p99 = scmp.eq.s32.totalorder %s19, 1
      %p100 = por %p98, %p99
      %p101 = scmp.ne.s32.totalorder %s92, %s93
      %p102 = scmp.eq.s32.totalorder %s19, 0
      %p103 = por %p101, %p102
      %p104 = scmp.ne.s32.totalorder %s92, %s93
      %p105 = scmp.eq.s32.totalorder %s20, 1
      %p106 = por %p104, %p105
      %p108 = scmp.ne.s32.totalorder %s93, %s107
      %p109 = scmp.eq.s32.totalorder %s20, 0
      %p110 = por %p108, %p109
      %s112 = sadd.s32 %s111, 1
      %p115 = scmp.eq.s32.totalorder %s14, 1
      %p116 = scmp.ne.s32.totalorder %s111, %s113
      %p117 = scmp.eq.s32.totalorder %s14, 0
      %p118 = por %p116, %p117
      %p119 = scmp.ne.s32.totalorder %s111, %s113
      %p120 = scmp.eq.s32.totalorder %s19, 1
      %p121 = por %p119, %p120
      %p122 = scmp.ne.s32.totalorder %s113, %s114
      %p123 = scmp.eq.s32.totalorder %s19, 0
      %p124 = por %p122, %p123
      %p125 = scmp.ne.s32.totalorder %s113, %s114
      %p126 = scmp.eq.s32.totalorder %s20, 1
      %p127 = por %p125, %p126
      %p129 = scmp.ne.s32.totalorder %s114, %s128
      %p130 = scmp.eq.s32.totalorder %s20, 0
      %p131 = por %p129, %p130
      %s132 = ssub.s32 %s14, %s21
      %p133 = scmp.eq.s32.totalorder %s132, 0
      %s135 = sadd.s32 %s134, 1
      %s136 = scalar_select %p133, %s134, %s135
      %p139 = pneg %p133
      %p140 = scmp.eq.s32.totalorder %s14, 1
      %p141 = por %p139, %p140
      %p142 = scmp.ne.s32.totalorder %s134, %s137
      %p143 = scmp.eq.s32.totalorder %s14, 0
      %p144 = por %p142, %p143
      %p145 = scmp.ne.s32.totalorder %s134, %s137
      %p146 = scmp.eq.s32.totalorder %s19, 1
      %p147 = por %p145, %p146
      %p148 = scmp.ne.s32.totalorder %s137, %s138
      %p149 = scmp.eq.s32.totalorder %s19, 0
      %p150 = por %p148, %p149
      %p151 = scmp.ne.s32.totalorder %s137, %s138
      %p152 = scmp.eq.s32.totalorder %s20, 1
      %p153 = por %p151, %p152
      %p155 = scmp.ne.s32.totalorder %s138, %s154
      %p156 = scmp.eq.s32.totalorder %s20, 0
      %p157 = por %p155, %p156
      %p158 = scmp.le.s32.totalorder 1, %s14
      %p159 = scmp.lt.s32.totalorder %s14, 3
      %p160 = pnand %p158, %p159
      %p161 = pneg %p160
      // Predicated region
      $region9: #{tpu_custom_call.1} parent=5 // pred_check
        _
      $region10: #{tpu_custom_call.1} parent=5 // pred_check_branch
        %163 = sbr.rel (%p160) target = $region12
      $region11: #{tpu_custom_call.1} parent=5 // pred_region
        %s164 = ssub.s32 %s14, 1
        // Predicated region
        $region13: #{tpu_custom_call.1} parent=11 // pred_check
          %p165 = pneg %p61
        $region14: #{tpu_custom_call.1} parent=11 // pred_check_branch
          %167 = sbr.rel (%p165) target = $region16
        $region15: #{tpu_custom_call.1} parent=11 // pred_region
          _
        $region16: #{tpu_custom_call.1} parent=11 // pred_fallthru
          _
        // Predicated region
        $region17: #{tpu_custom_call.1} parent=11 // pred_check
          %p168 = pneg %p82
        $region18: #{tpu_custom_call.1} parent=11 // pred_check_branch
          %170 = sbr.rel (%p168) target = $region20
        $region19: #{tpu_custom_call.1} parent=11 // pred_region
          _
        $region20: #{tpu_custom_call.1} parent=11 // pred_fallthru
          _
        // Predicated region
        $region21: #{tpu_custom_call.1} parent=11 // pred_check
          %p171 = pneg %p103
        $region22: #{tpu_custom_call.1} parent=11 // pred_check_branch
          %173 = sbr.rel (%p171) target = $region24
        $region23: #{tpu_custom_call.1} parent=11 // pred_region
          _
        $region24: #{tpu_custom_call.1} parent=11 // pred_fallthru
          _
        // Predicated region
        $region25: #{tpu_custom_call.1} parent=11 // pred_check
          %p174 = pneg %p124
        $region26: #{tpu_custom_call.1} parent=11 // pred_check_branch
          %176 = sbr.rel (%p174) target = $region28
        $region27: #{tpu_custom_call.1} parent=11 // pred_region
          _
        $region28: #{tpu_custom_call.1} parent=11 // pred_fallthru
          _
      $region12: #{tpu_custom_call.1} parent=5 // pred_fallthru
        _
      %p177 = scmp.lt.s32.totalorder %s14, 2
      // Predicated region
      $region29: #{tpu_custom_call.1} parent=5 // pred_check
        %p178 = pneg %p177
      $region30: #{tpu_custom_call.1} parent=5 // pred_check_branch
        %180 = sbr.rel (%p178) target = $region32
      $region31: #{tpu_custom_call.1} parent=5 // pred_region
        // Predicated region
        $region33: #{tpu_custom_call.1} parent=31 // pred_check
          %p181 = pneg %p34
        $region34: #{tpu_custom_call.1} parent=31 // pred_check_branch
          %183 = sbr.rel (%p181) target = $region36
        $region35: #{tpu_custom_call.1} parent=31 // pred_region
          %s184 = sand.u32 %s24, 1
          %s185 = scalar_lea.sflag [#allocation5], %s184
          %s186 = sand.u32 %s24, 1
          %s187 = smul.addr %s186, 8
          %s188 = scalar_lea.vmem [#allocation4], %s187
          %s190 = ssub.s32 128, 128
          %191 = vsyncadd %s185, %s190
          %s192 = smul.addr %s14, 2
          %s193 = smul.addr %s192, 64
          %s194 = scalar_lea.hbm %s0, %s193
          %s196 = sshll.u32 %s188, 4
          %s197 = int_to_ptr.vmem [resolvable:$true] %s196
          %199 = dma.hbm_to_vmem [thread:$0]  %s194, 128, %s197, %s185
        $region36: #{tpu_custom_call.1} parent=31 // pred_fallthru
          _
      $region32: #{tpu_custom_call.1} parent=5 // pred_fallthru
        _
      %p200 = scmp.le.s32.totalorder 1, %s14
      %p201 = scmp.lt.s32.totalorder %s14, 3
      %p202 = pnand %p200, %p201
      %p203 = pneg %p202
      // Predicated region
      $region37: #{tpu_custom_call.1} parent=5 // pred_check
        _
      $region38: #{tpu_custom_call.1} parent=5 // pred_check_branch
        %205 = sbr.rel (%p202) target = $region40
      $region39: #{tpu_custom_call.1} parent=5 // pred_region
        %s206 = ssub.s32 %s14, 1
        %s207 = sand.u32 %s27, 1
        %s208 = scalar_lea.sflag [#allocation5], %s207
        %s209 = sand.u32 %s27, 1
        %s210 = smul.addr %s209, 8
        %s211 = scalar_lea.vmem [#allocation4], %s210
        // Predicated region
        $region41: #{tpu_custom_call.1} parent=39 // pred_check
          %p212 = pneg %p40
        $region42: #{tpu_custom_call.1} parent=39 // pred_check_branch
          %214 = sbr.rel (%p212) target = $region44
        $region43: #{tpu_custom_call.1} parent=39 // pred_region
          %215 = dma.done %s208, 128
        $region44: #{tpu_custom_call.1} parent=39 // pred_fallthru
          _
        %s216 = sand.u32 %s27, 1
        %s217 = scalar_lea.sflag [#allocation5], %s216
        %s218 = sand.u32 %s27, 1
        %s219 = smul.addr %s218, 8
        %s220 = scalar_lea.vmem [#allocation4], %s219
        %p221 = pneg %p40
        %p222 = pneg %p37
        %p223 = pneg %p61
        %p224 = pneg %p58
        %p225 = pneg %p82
        %p226 = pneg %p79
        %p227 = pneg %p103
        %p228 = pneg %p100
        %p229 = pneg %p124
        %p230 = pneg %p121
        %p231 = pneg %p150
        %p232 = pneg %p147
        %p233 = scmp.lt.s32.totalorder %s19, 1
        %s234 = scalar_select %p233, %s19, 1
        %s235 = smul.addr %s234, 4
        %s236 = smul.addr %s235, 8
        %s237 = scalar_lea.vmem %s5, %s236
        %p238 = scmp.lt.s32.totalorder %s19, 1
        %s239 = scalar_select %p238, %s19, 1
        %s240 = smul.addr %s239, 4
        %s241 = smul.addr %s240, 8
        %s242 = scalar_lea.vmem %s5, %s241
        %v243 = vld [vmem:[%s211] sm:$0xff]
        %v244 = vld [vmem:[%s2] sm:$0xf]
        %246 = vset.pattern.permute.xlu0 0
        %247 = vperm.xlu0 %246, %v244
        %v248 = vpop.permute.xlu0 %247
        %v250 = vunpack.c.l.s4 839922192
        %v251 = vunpack.c.0.s8 %v250
        %v252 = vlaneseq
        %v253 = vshrl.u32 %v252, 7
        %v254 = vsub.s32 %v251, %v253
        %v255 = vrot.slane %v248, %v254
        %v257 = vmul.f32 %v243, %v255
        %v258 = vld [vmem:[%s3] sm:$0xf]
        %260 = vset.pattern.permute.xlu0 0
        %261 = vperm.xlu0 %260, %v258
        %v262 = vpop.permute.xlu0 %261
        %v264 = vunpack.c.l.s4 839922192
        %v265 = vunpack.c.0.s8 %v264
        %v266 = vlaneseq
        %v267 = vshrl.u32 %v266, 7
        %v268 = vsub.s32 %v265, %v267
        %v269 = vrot.slane %v262, %v268
        %v271 = vadd.f32 %v257, %v269
        %v272 = vmax.f32 %v271, 0.0
        %273 = vst [vmem:[#allocation2] sm:$0xff] 0.0
        %vm274 = vcmask 273408
        %275 = vst.msk [vmem:[#allocation2 + $0x8] sm:$0xf] %vm274, 0.0
        %277 = vrot.lane.b32.xlu0 %v272, 17
        %v278 = vpop.permute.xlu0 %277
        %v279 = vrot.slane %v278, 4
        %vm280 = vcmask 138240
        %v281 = vsel %vm280, %v279, %v278
        %vm284 = vcmask 1043592
        %vm285 = vcmask 1047556
        %vm286 = vmor %vm285, %vm284
        %287 = vst.msk [vmem:[#allocation2] sm:$0xff] %vm286, %v281
        %vm288 = vcmask 134144
        %289 = vst.msk [vmem:[#allocation2 + $0x8] sm:$0xf] %vm288, %v279
        %v290 = vld [vmem:[#allocation2] sm:$0xff]
        %v291 = vld [vmem:[%s4] ss:$4 sm:$0x3]
        %v293 = vlaneseq
        %v294 = vshrl.u32 %v293, 7
        %v295 = vsub.s32 0, %v294
        %v296 = vrot.slane %v291, %v295
        %v297 = vlaneseq
        %v298 = vshrl.u32 %v297, 7
        %v299 = vsub.s32 1, %v298
        %v300 = vrot.slane %v291, %v299
        %v301 = vcombine.low %v296, %v300
        %v303 = vmul.f32 %v290, %v301
        %v305 = vcombine.high %v303, %v303
        %307 = vst [vmem:[#allocation3] sm:$0xf] %v303
        %308 = vst [vmem:[#allocation3 + $0x8] sm:$0xf] %v305
        %v309 = vld [vmem:[#allocation2] sm:$0xff]
        %v310 = vld [vmem:[#allocation2 + $0x8] sm:$0xf]
        %v313 = vcombine.low %v309, %v309
        %v314 = vcombine.low %v310, %v310
        %315 = vrot.lane.b32.xlu0 %v313, 127
        %v316 = vpop.permute.xlu0 %315
        %317 = vrot.lane.b32.xlu0 %v309, 127
        %v318 = vpop.permute.xlu0 %317
        %319 = vrot.lane.b32.xlu0 %v314, 127
        %v320 = vpop.permute.xlu0 %319
        %vm321 = vcmask 1039360
        %v322 = vsel %vm321, %v316, %v318
        %v323 = vsel %vm321, %v318, %v320
        %326 = vst [vmem:[#allocation3] sm:$0xf0] %v322
        %327 = vst [vmem:[#allocation3 + $0x8] sm:$0xf0] %v323
        %v328 = vld [vmem:[#allocation2] sm:$0xff]
        %v329 = vld [vmem:[#allocation2 + $0x8] sm:$0xf]
        %s330 = scalar_lea.vmem %s4, 2
        %v331 = vld [vmem:[%s330] ss:$4 sm:$0x3]
        %v333 = vlaneseq
        %v334 = vshrl.u32 %v333, 7
        %v335 = vsub.s32 0, %v334
        %v336 = vrot.slane %v331, %v335
        %v337 = vlaneseq
        %v338 = vshrl.u32 %v337, 7
        %v339 = vsub.s32 1, %v338
        %v340 = vrot.slane %v331, %v339
        %v341 = vcombine.low %v336, %v340
        %342 = vrot.lane.b32.xlu0 %v341, 2
        %v343 = vpop.permute.xlu0 %342
        %v344 = vrot.slane %v343, 4
        %vm345 = vcmask 15360
        %v346 = vsel %vm345, %v344, %v343
        %v349 = vmul.f32 %v328, %v346
        %v350 = vmul.f32 %v329, %v344
        %v353 = vcombine.high %v349, %v349
        %354 = vrot.lane.b32.xlu0 %v349, 126
        %v355 = vpop.permute.xlu0 %354
        %356 = vrot.lane.b32.xlu0 %v353, 126
        %v357 = vpop.permute.xlu0 %356
        %358 = vrot.lane.b32.xlu0 %v350, 126
        %v359 = vpop.permute.xlu0 %358
        %vm360 = vcmask 1031168
        %v361 = vsel %vm360, %v355, %v357
        %v362 = vsel %vm360, %v357, %v359
        %365 = vst [vmem:[#allocation3 + $0x10] sm:$0xf] %v361
        %366 = vst [vmem:[#allocation3 + $0x18] sm:$0xf] %v362
        %v367 = vld [vmem:[#allocation2] sm:$0xff]
        %v368 = vld [vmem:[#allocation2 + $0x8] sm:$0xf]
        %v369 = vld [vmem:[%s4] ss:$4 sm:$0x3]
        %v371 = vlaneseq
        %v372 = vshrl.u32 %v371, 7
        %v373 = vsub.s32 0, %v372
        %v374 = vrot.slane %v369, %v373
        %v375 = vlaneseq
        %v376 = vshrl.u32 %v375, 7
        %v377 = vsub.s32 1, %v376
        %v378 = vrot.slane %v369, %v377
        %v379 = vcombine.low %v374, %v378
        %380 = vrot.lane.b32.xlu0 %v379, 16
        %v381 = vpop.permute.xlu0 %380
        %v382 = vrot.slane %v381, 4
        %vm383 = vcmask 130048
        %v384 = vsel %vm383, %v382, %v381
        %v387 = vmul.f32 %v367, %v384
        %v388 = vmul.f32 %v368, %v382
        %v391 = vcombine.low %v387, %v387
        %v392 = vcombine.low %v388, %v388
        %393 = vrot.lane.b32.xlu0 %v391, 112
        %v394 = vpop.permute.xlu0 %393
        %395 = vrot.lane.b32.xlu0 %v387, 112
        %v396 = vpop.permute.xlu0 %395
        %397 = vrot.lane.b32.xlu0 %v392, 112
        %v398 = vpop.permute.xlu0 %397
        %vm399 = vcmask 916480
        %v400 = vsel %vm399, %v394, %v396
        %v401 = vsel %vm399, %v396, %v398
        %404 = vst [vmem:[#allocation3 + $0x10] sm:$0xf0] %v400
        %405 = vst [vmem:[#allocation3 + $0x18] sm:$0xf0] %v401
        %v406 = vld [vmem:[#allocation2] sm:$0xff]
        %v407 = vld [vmem:[#allocation2 + $0x8] sm:$0xf]
        %v410 = vcombine.high %v406, %v406
        %411 = vrot.lane.b32.xlu0 %v406, 111
        %v412 = vpop.permute.xlu0 %411
        %413 = vrot.lane.b32.xlu0 %v410, 111
        %v414 = vpop.permute.xlu0 %413
        %415 = vrot.lane.b32.xlu0 %v407, 111
        %v416 = vpop.permute.xlu0 %415
        %vm417 = vcmask 908288
        %v418 = vsel %vm417, %v412, %v414
        %v419 = vsel %vm417, %v414, %v416
        %422 = vst [vmem:[#allocation3 + $0x20] sm:$0xf] %v418
        %423 = vst [vmem:[#allocation3 + $0x28] sm:$0xf] %v419
        %v424 = vld [vmem:[#allocation2] sm:$0xff]
        %v425 = vld [vmem:[#allocation2 + $0x8] sm:$0xf]
        %v426 = vld [vmem:[%s330] ss:$4 sm:$0x3]
        %v428 = vlaneseq
        %v429 = vshrl.u32 %v428, 7
        %v430 = vsub.s32 0, %v429
        %v431 = vrot.slane %v426, %v430
        %v432 = vlaneseq
        %v433 = vshrl.u32 %v432, 7
        %v434 = vsub.s32 1, %v433
        %v435 = vrot.slane %v426, %v434
        %v436 = vcombine.low %v431, %v435
        %437 = vrot.lane.b32.xlu0 %v436, 18
        %v438 = vpop.permute.xlu0 %437
        %v439 = vrot.slane %v438, 4
        %vm440 = vcmask 146432
        %v441 = vsel %vm440, %v439, %v438
        %v444 = vmul.f32 %v424, %v441
        %v445 = vmul.f32 %v425, %v439
        %v448 = vcombine.low %v444, %v444
        %v449 = vcombine.low %v445, %v445
        %450 = vrot.lane.b32.xlu0 %v448, 110
        %v451 = vpop.permute.xlu0 %450
        %452 = vrot.lane.b32.xlu0 %v444, 110
        %v453 = vpop.permute.xlu0 %452
        %454 = vrot.lane.b32.xlu0 %v449, 110
        %v455 = vpop.permute.xlu0 %454
        %vm456 = vcmask 900096
        %v457 = vsel %vm456, %v451, %v453
        %v458 = vsel %vm456, %v453, %v455
        %461 = vst [vmem:[#allocation3 + $0x20] sm:$0xf0] %v457
        %462 = vst [vmem:[#allocation3 + $0x28] sm:$0xf0] %v458
        %v463 = vld [vmem:[#allocation2] sm:$0xff]
        %v464 = vld [vmem:[#allocation2 + $0x8] sm:$0xf]
        %v465 = vld [vmem:[%s4] ss:$4 sm:$0x3]
        %v467 = vlaneseq
        %v468 = vshrl.u32 %v467, 7
        %v469 = vsub.s32 0, %v468
        %v470 = vrot.slane %v465, %v469
        %v471 = vlaneseq
        %v472 = vshrl.u32 %v471, 7
        %v473 = vsub.s32 1, %v472
        %v474 = vrot.slane %v465, %v473
        %v475 = vcombine.low %v470, %v474
        %476 = vrot.lane.b32.xlu0 %v475, 32
        %v477 = vpop.permute.xlu0 %476
        %v478 = vrot.slane %v477, 4
        %vm479 = vcmask 261120
        %v480 = vsel %vm479, %v478, %v477
        %v483 = vmul.f32 %v463, %v480
        %v484 = vmul.f32 %v464, %v478
        %v487 = vcombine.high %v483, %v483
        %488 = vrot.lane.b32.xlu0 %v483, 96
        %v489 = vpop.permute.xlu0 %488
        %490 = vrot.lane.b32.xlu0 %v487, 96
        %v491 = vpop.permute.xlu0 %490
        %492 = vrot.lane.b32.xlu0 %v484, 96
        %v493 = vpop.permute.xlu0 %492
        %vm494 = vcmask 785408
        %v495 = vsel %vm494, %v489, %v491
        %v496 = vsel %vm494, %v491, %v493
        %499 = vst [vmem:[#allocation3 + $0x30] sm:$0xf] %v495
        %500 = vst [vmem:[#allocation3 + $0x38] sm:$0xf] %v496
        %v501 = vld [vmem:[#allocation2] sm:$0xff]
        %v502 = vld [vmem:[#allocation2 + $0x8] sm:$0xf]
        %v505 = vcombine.low %v501, %v501
        %v506 = vcombine.low %v502, %v502
        %507 = vrot.lane.b32.xlu0 %v505, 95
        %v508 = vpop.permute.xlu0 %507
        %509 = vrot.lane.b32.xlu0 %v501, 95
        %v510 = vpop.permute.xlu0 %509
        %511 = vrot.lane.b32.xlu0 %v506, 95
        %v512 = vpop.permute.xlu0 %511
        %vm513 = vcmask 777216
        %v514 = vsel %vm513, %v508, %v510
        %v515 = vsel %vm513, %v510, %v512
        %518 = vst [vmem:[#allocation3 + $0x30] sm:$0xf0] %v514
        %519 = vst [vmem:[#allocation3 + $0x38] sm:$0xf0] %v515
        %v520 = vld [vmem:[#allocation2] sm:$0xff]
        %v521 = vld [vmem:[#allocation2 + $0x8] sm:$0xf]
        %v522 = vld [vmem:[%s330] ss:$4 sm:$0x3]
        %v524 = vlaneseq
        %v525 = vshrl.u32 %v524, 7
        %v526 = vsub.s32 0, %v525
        %v527 = vrot.slane %v522, %v526
        %v528 = vlaneseq
        %v529 = vshrl.u32 %v528, 7
        %v530 = vsub.s32 1, %v529
        %v531 = vrot.slane %v522, %v530
        %v532 = vcombine.low %v527, %v531
        %533 = vrot.lane.b32.xlu0 %v532, 34
        %v534 = vpop.permute.xlu0 %533
        %v535 = vrot.slane %v534, 4
        %vm536 = vcmask 277504
        %v537 = vsel %vm536, %v535, %v534
        %v540 = vmul.f32 %v520, %v537
        %v541 = vmul.f32 %v521, %v535
        %v544 = vcombine.high %v540, %v540
        %545 = vrot.lane.b32.xlu0 %v540, 94
        %v546 = vpop.permute.xlu0 %545
        %547 = vrot.lane.b32.xlu0 %v544, 94
        %v548 = vpop.permute.xlu0 %547
        %549 = vrot.lane.b32.xlu0 %v541, 94
        %v550 = vpop.permute.xlu0 %549
        %vm551 = vcmask 769024
        %v552 = vsel %vm551, %v546, %v548
        %v553 = vsel %vm551, %v548, %v550
        %556 = vst [vmem:[#allocation3 + $0x40] sm:$0xf] %v552
        %557 = vst [vmem:[#allocation3 + $0x48] sm:$0xf] %v553
        %v558 = vld [vmem:[%s1] sm:$0xff]
        %v559 = vld [vmem:[#allocation3] sm:$0xff]
        %v560 = vld [vmem:[#allocation3 + $0x8] sm:$0xff]
        %v561 = vld [vmem:[#allocation3 + $0x10] sm:$0xff]
        %v562 = vld [vmem:[#allocation3 + $0x18] sm:$0xff]
        %v563 = vld [vmem:[#allocation3 + $0x20] sm:$0xff]
        %v564 = vld [vmem:[#allocation3 + $0x28] sm:$0xff]
        %v565 = vld [vmem:[#allocation3 + $0x30] sm:$0xff]
        %v566 = vld [vmem:[#allocation3 + $0x38] sm:$0xff]
        %v567 = vld [vmem:[#allocation3 + $0x40] sm:$0xf]
        %v568 = vld [vmem:[#allocation3 + $0x48] sm:$0xf]
        %vm569 = vcmask 293888
        %v571 = vsel %vm569, %v558, 0
        %vm573 = vcmask 1043456
        %v575 = vsel %vm573, %v567, 0
        %v578 = vsel %vm573, %v568, 0
        %580 = vmatprep.subr.mxu0 0.0
        %581 = vmatpush1.msra.mxu0 0.0
        %582 = vmatprep.subr.mxu0 0.0
        %583 = vmatpush1.msra.mxu0 0.0
        %584 = vmatprep.subr.mxu0 0.0
        %585 = vmatpush1.msra.mxu0 0.0
        %586 = vmatprep.subr.mxu0 0.0
        %587 = vmatpush1.msra.mxu0 0.0
        %588 = vmatprep.subr.mxu0 0.0
        %589 = vmatpush1.msra.mxu0 0.0
        %590 = vmatprep.subr.mxu0 0.0
        %591 = vmatpush1.msra.mxu0 0.0
        %592 = vmatprep.subr.mxu0 0.0
        %593 = vmatpush1.msra.mxu0 0.0
        %594 = vmatprep.subr.mxu0 0.0
        %595 = vmatpush1.msra.mxu0 0.0
        %596 = vmatprep.subr.mxu0 0.0
        %597 = vmatpush1.msra.mxu0 0.0
        %598 = vmatprep.subr.mxu0 0.0
        %599 = vmatpush1.msra.mxu0 0.0
        %600 = vmatprep.subr.mxu0 0.0
        %601 = vmatpush1.msra.mxu0 0.0
        %602 = vmatprep.subr.mxu0 %v578
        %603 = vmatpush1.msra.mxu0 %v575
        %604 = vmatprep.subr.mxu0 %v566
        %605 = vmatpush1.msra.mxu0 %v565
        %606 = vmatprep.subr.mxu0 %v564
        %607 = vmatpush1.msra.mxu0 %v563
        %608 = vmatprep.subr.mxu0 %v562
        %609 = vmatpush1.msra.mxu0 %v561
        %610 = vmatprep.subr.mxu0 %v560
        %611 = vmatpush1.msra.mxu0 %v559
        %612 = vmatprep.subr.mxu0 0.0
        %613 = vmatpush2.msra.mxu0 0.0
        %614 = vmatprep.subr.mxu0 0.0
        %615 = vmatpush2.msra.mxu0 0.0
        %616 = vmatprep.subr.mxu0 0.0
        %617 = vmatpush2.msra.mxu0 0.0
        %618 = vmatprep.subr.mxu0 0.0
        %619 = vmatpush2.msra.mxu0 0.0
        %620 = vmatprep.subr.mxu0 0.0
        %621 = vmatpush2.msra.mxu0 0.0
        %622 = vmatprep.subr.mxu0 0.0
        %623 = vmatpush2.msra.mxu0 0.0
        %624 = vmatprep.subr.mxu0 0.0
        %625 = vmatpush2.msra.mxu0 0.0
        %626 = vmatprep.subr.mxu0 0.0
        %627 = vmatpush2.msra.mxu0 0.0
        %628 = vmatprep.subr.mxu0 0.0
        %629 = vmatpush2.msra.mxu0 0.0
        %630 = vmatprep.subr.mxu0 0.0
        %631 = vmatpush2.msra.mxu0 0.0
        %632 = vmatprep.subr.mxu0 0.0
        %633 = vmatpush2.msra.mxu0 0.0
        %634 = vmatprep.subr.mxu0 0.0
        %635 = vmatpush2.msra.mxu0 0.0
        %636 = vmatprep.subr.mxu0 0.0
        %637 = vmatpush2.msra.mxu0 0.0
        %638 = vmatprep.subr.mxu0 0.0
        %639 = vmatpush2.msra.mxu0 0.0
        %640 = vmatprep.subr.mxu0 0.0
        %641 = vmatpush2.msra.mxu0 0.0
        %642 = vmatprep.subr.mxu0 0.0
        %643 = vmatpush2.msra.mxu0 0.0
        %644 = vmatprep.mubr.f32.mxu0 0.0
        %645 = vmatmul.mubr.f32.gmra.mxu0 %v571
        %v646 = vpop.f32.mrf.mxu0
        %v647 = vadd.f32 0.0, %v646
        %v648 = vpop.f32.mrf.mxu0
        %v649 = vadd.f32 0.0, %v648
        %650 = vdwg.mxu0
        %v652 = vcombine.high %v243, %v243
        %654 = vst [vmem:[%s242] sm:$0xf] %v243
        %655 = vst [vmem:[%s242 + $0x8] sm:$0xf] %v652
        %v658 = vrot.slane %v647, 4
        %v659 = vrot.slane %v649, 4
        %662 = vst [vmem:[%s242] sm:$0xf0] %v658
        %663 = vst [vmem:[%s242 + $0x8] sm:$0xf0] %v659
        %664 = vst [vmem:[%s242 + $0x10] sm:$0xf] %v658
        %665 = vst [vmem:[%s242 + $0x18] sm:$0xf] %v659
        %p666 = scmp.lt.s32.totalorder %s19, 1
        %s667 = scalar_select %p666, %s19, 1
        %s668 = smul.addr %s667, 4
        %s669 = smul.addr %s668, 8
        %s670 = scalar_lea.vmem %s5, %s669
        // Predicated region
        $region45: #{tpu_custom_call.1} parent=39 // pred_check
          %p671 = pneg %p147
        $region46: #{tpu_custom_call.1} parent=39 // pred_check_branch
          %673 = sbr.rel (%p671) target = $region48
        $region47: #{tpu_custom_call.1} parent=39 // pred_region
          _
        $region48: #{tpu_custom_call.1} parent=39 // pred_fallthru
          _
      $region40: #{tpu_custom_call.1} parent=5 // pred_fallthru
        _
      %p674 = scmp.le.s32.totalorder 2, %s14
      // Predicated region
      $region49: #{tpu_custom_call.1} parent=5 // pred_check
        %p675 = pneg %p674
      $region50: #{tpu_custom_call.1} parent=5 // pred_check_branch
        %677 = sbr.rel (%p675) target = $region52
      $region51: #{tpu_custom_call.1} parent=5 // pred_region
        %s678 = ssub.s32 %s14, 2
        // Predicated region
        $region53: #{tpu_custom_call.1} parent=51 // pred_check
          %p679 = pneg %p153
        $region54: #{tpu_custom_call.1} parent=51 // pred_check_branch
          %681 = sbr.rel (%p679) target = $region56
        $region55: #{tpu_custom_call.1} parent=51 // pred_region
          %p682 = scmp.lt.s32.totalorder %s20, 1
          %s683 = scalar_select %p682, %s20, 1
          %s684 = smul.addr %s683, 4
          %s685 = smul.addr %s684, 8
          %s686 = scalar_lea.vmem %s5, %s685
        $region56: #{tpu_custom_call.1} parent=51 // pred_fallthru
          _
      $region52: #{tpu_custom_call.1} parent=5 // pred_fallthru
        _
    $region6: #{tpu_custom_call.1} parent=1 // loop_footer
      %s18 = sadd.s32 1, %s14
    $region7: #{tpu_custom_call.1} parent=1 // loop_footer_branch
      %13 = sbr.rel target = $region3
    $region8: #{tpu_custom_call.1} parent=1 // loop_exit
      _
    %687 = vsyncpa [#allocation5], 1
    %s688 = scalar_lea.sflag [#allocation5], 1
    %689 = vsyncpa %s688, 1

</llo_original>
